<compile_context>
chip_gen: v5e
topology: v5e:2x2
jax: 0.10.0
libtpu: 0.0.40
codegen_flags: <defaults>
</compile_context>

<pallas_src>
import jax
import jax.numpy as jnp
from jax.experimental import pallas as pl
from jax.experimental.pallas import tpu as pltpu

IN_DIM = 4
HID_DIM = 100
OUT_DIM = 2

IN_PAD = 8      # input features padded onto sublanes (4 -> 8)
HID_PAD = 128   # hidden width padded onto lanes of the weights (100 -> 128)
OUT_PAD = 8     # output features padded onto sublanes (2 -> 8)

LANE = 128      # lane width (batch tile granularity)
MAX_TB = 4096   # batch columns per grid step


def _round_up(n, m):
    return ((n + m - 1) // m) * m


def qnet_kernel(x_ref, w1_ref, b1_ref, w2_ref, b2_ref, o_ref):
    # x_ref : (IN_PAD, TB)   feature-major input tile (batch on lanes)
    # w1_ref: (HID_PAD, IN_PAD), b1_ref: (HID_PAD, 1)
    # w2_ref: (OUT_PAD, HID_PAD), b2_ref: (OUT_PAD, 1)
    # o_ref : (OUT_PAD, TB)
    x = x_ref[...]                                                  # (8, TB)
    # Layer 1 on the MXU: (128, 8) @ (8, TB) -> (128, TB)
    h = jnp.dot(w1_ref[...], x, preferred_element_type=jnp.float32)
    h = jnp.maximum(h + b1_ref[...], 0.0)
    # Layer 2, weight-stationary MXU pass: (8, 128) @ (128, TB) -> (8, TB)
    y = jnp.dot(w2_ref[...], h, preferred_element_type=jnp.float32)
    o_ref[...] = (y + b2_ref[...]).astype(o_ref.dtype)


def init_params(key):
    """PyTorch-layout params: w1 (100,4), b1 (100,), w2 (2,100), b2 (2,)."""
    k1, k2, k3, k4 = jax.random.split(key, 4)
    bound1 = 1.0 / jnp.sqrt(float(IN_DIM))
    bound2 = 1.0 / jnp.sqrt(float(HID_DIM))
    w1 = jax.random.uniform(k1, (HID_DIM, IN_DIM), jnp.float32, -bound1, bound1)
    b1 = jax.random.uniform(k2, (HID_DIM,), jnp.float32, -bound1, bound1)
    w2 = jax.random.uniform(k3, (OUT_DIM, HID_DIM), jnp.float32, -bound2, bound2)
    b2 = jax.random.uniform(k4, (OUT_DIM,), jnp.float32, -bound2, bound2)
    return w1, b1, w2, b2


def prepare_params(w1, b1, w2, b2):
    """One-time, out-of-hot-path zero padding into kernel (feature-major) layout.

    Zero padding is exact: padded hidden rows are 0 after ReLU (zero w1 rows /
    zero b1 entries), padded w2 rows/cols and b2 entries contribute 0, and the
    padded x feature rows meet zero w1 columns.
    """
    w1p = jnp.zeros((HID_PAD, IN_PAD), jnp.float32).at[:HID_DIM, :IN_DIM].set(w1)
    b1p = jnp.zeros((HID_PAD, 1), jnp.float32).at[:HID_DIM, 0].set(b1)
    w2p = jnp.zeros((OUT_PAD, HID_PAD), jnp.float32).at[:OUT_DIM, :HID_DIM].set(w2)
    b2p = jnp.zeros((OUT_PAD, 1), jnp.float32).at[:OUT_DIM, 0].set(b2)
    return w1p, b1p, w2p, b2p


def qnet_forward(x, padded_params):
    """x: (B, 4) float32 -> (B, 2) float32.  padded_params from prepare_params."""
    w1p, b1p, w2p, b2p = padded_params
    B = x.shape[0]

    # Batch tile: multiple of 128 lanes, up to MAX_TB columns per grid step.
    TB = min(MAX_TB, _round_up(max(B, 1), LANE))
    Bp = _round_up(max(B, 1), TB)
    grid = (Bp // TB,)

    # Feature-major, sublane/lane padded input: (IN_PAD, Bp).
    xt = jnp.pad(x.T.astype(jnp.float32), ((0, IN_PAD - IN_DIM), (0, Bp - B)))

    cost = pl.CostEstimate(
        flops=2 * Bp * (HID_PAD * IN_PAD + OUT_PAD * HID_PAD),
        transcendentals=0,
        bytes_accessed=4 * (IN_PAD * Bp + OUT_PAD * Bp
                            + HID_PAD * IN_PAD + HID_PAD
                            + OUT_PAD * HID_PAD + OUT_PAD),
    )

    out = pl.pallas_call(
        qnet_kernel,
        out_shape=jax.ShapeDtypeStruct((OUT_PAD, Bp), jnp.float32),
        grid=grid,
        in_specs=[
            pl.BlockSpec((IN_PAD, TB), lambda i: (0, i)),          # x tile
            pl.BlockSpec((HID_PAD, IN_PAD), lambda i: (0, 0)),     # w1 (grid-invariant)
            pl.BlockSpec((HID_PAD, 1), lambda i: (0, 0)),          # b1
            pl.BlockSpec((OUT_PAD, HID_PAD), lambda i: (0, 0)),    # w2
            pl.BlockSpec((OUT_PAD, 1), lambda i: (0, 0)),          # b2
        ],
        out_specs=pl.BlockSpec((OUT_PAD, TB), lambda i: (0, i)),
        compiler_params=pltpu.CompilerParams(
            dimension_semantics=("parallel",),
        ),
        cost_estimate=cost,
    )(xt, w1p, b1p, w2p, b2p)

    # Slice away sublane padding (8 -> 2) and batch padding, back to (B, 2).
    return out[:OUT_DIM, :B].T


if __name__ == "__main__":
    key = jax.random.PRNGKey(0)
    pkey, xkey = jax.random.split(key)
    w1, b1, w2, b2 = init_params(pkey)
    params = prepare_params(w1, b1, w2, b2)   # pad once, outside the hot path

    batch = 8  # CartPole state dim is 4; B=8 is just a smoke test.
    x = jax.random.normal(xkey, (batch, IN_DIM), jnp.float32)

    out = qnet_forward(x, params)
    out = jax.block_until_ready(out)

    # Reference in plain JAX (same math as the PyTorch forward).
    ref = jnp.maximum(x @ w1.T + b1, 0.0) @ w2.T + b2
    assert out.shape == (batch, OUT_DIM)
    assert jnp.allclose(out, ref, atol=1e-5, rtol=1e-5)

    print("KERNEL_OK")
</pallas_src>

<mosaic_0001>
module attributes {stable_mosaic.version = 11 : i64} {
  func.func @qnet_kernel(%arg0: i32, %arg1: memref<8x128xf32, #tpu.memory_space<vmem>>, %arg2: memref<128x8xf32, #tpu.memory_space<vmem>>, %arg3: memref<128x1xf32, #tpu.memory_space<vmem>>, %arg4: memref<8x128xf32, #tpu.memory_space<vmem>>, %arg5: memref<8x1xf32, #tpu.memory_space<vmem>>, %arg6: memref<8x128xf32, #tpu.memory_space<vmem>>) attributes {dimension_semantics = [#tpu.dimension_semantics<parallel>], iteration_bounds = array<i64: 1>, scalar_prefetch = 0 : i64, scratch_operands = 0 : i64, tpu.core_type = #tpu.core_type<tc>, window_params = [{transform_indices = @transform_0, window_bounds = array<i64: 8, 128>}, {pipeline_mode = #tpu.pipeline_mode<synchronous>, transform_indices = @transform_1, window_bounds = array<i64: 128, 8>}, {pipeline_mode = #tpu.pipeline_mode<synchronous>, transform_indices = @transform_2, window_bounds = array<i64: 128, 1>}, {pipeline_mode = #tpu.pipeline_mode<synchronous>, transform_indices = @transform_3, window_bounds = array<i64: 8, 128>}, {pipeline_mode = #tpu.pipeline_mode<synchronous>, transform_indices = @transform_4, window_bounds = array<i64: 8, 1>}, {transform_indices = @transform_5, window_bounds = array<i64: 8, 128>}]} {
    %c0 = arith.constant 0 : index
    %c0_0 = arith.constant 0 : index
    %0 = vector.load %arg1[%c0, %c0_0] : memref<8x128xf32, #tpu.memory_space<vmem>>, vector<8x128xf32>
    %c0_1 = arith.constant 0 : index
    %c0_2 = arith.constant 0 : index
    %1 = vector.load %arg2[%c0_1, %c0_2] : memref<128x8xf32, #tpu.memory_space<vmem>>, vector<128x8xf32>
    %cst = arith.constant dense<0.000000e+00> : vector<128x128xf32>
    %2 = tpu.matmul %1, %0, %cst {dimension_numbers = #tpu.dot_dimension_numbers<[1], [0], [0], [1], [0, 0, 1, 1], [], []>} : vector<128x8xf32>, vector<8x128xf32>, vector<128x128xf32> -> vector<128x128xf32>
    %c0_3 = arith.constant 0 : index
    %c0_4 = arith.constant 0 : index
    %3 = vector.load %arg3[%c0_3, %c0_4] : memref<128x1xf32, #tpu.memory_space<vmem>>, vector<128x1xf32>
    %4 = vector.broadcast %3 : vector<128x1xf32> to vector<128x128xf32>
    %5 = arith.addf %2, %4 : vector<128x128xf32>
    %cst_5 = arith.constant 0.000000e+00 : f32
    %6 = vector.broadcast %cst_5 : f32 to vector<128x128xf32>
    %7 = arith.maximumf %5, %6 : vector<128x128xf32>
    %c0_6 = arith.constant 0 : index
    %c0_7 = arith.constant 0 : index
    %8 = vector.load %arg4[%c0_6, %c0_7] : memref<8x128xf32, #tpu.memory_space<vmem>>, vector<8x128xf32>
    %cst_8 = arith.constant dense<0.000000e+00> : vector<8x128xf32>
    %9 = tpu.matmul %8, %7, %cst_8 {dimension_numbers = #tpu.dot_dimension_numbers<[1], [0], [0], [1], [0, 0, 1, 1], [], []>} : vector<8x128xf32>, vector<128x128xf32>, vector<8x128xf32> -> vector<8x128xf32>
    %c0_9 = arith.constant 0 : index
    %c0_10 = arith.constant 0 : index
    %10 = vector.load %arg5[%c0_9, %c0_10] : memref<8x1xf32, #tpu.memory_space<vmem>>, vector<8x1xf32>
    %11 = vector.broadcast %10 : vector<8x1xf32> to vector<8x128xf32>
    %12 = arith.addf %9, %11 : vector<8x128xf32>
    %c0_11 = arith.constant 0 : index
    %c0_12 = arith.constant 0 : index
    %13 = vector.load %arg6[%c0_11, %c0_12] : memref<8x128xf32, #tpu.memory_space<vmem>>, vector<8x128xf32>
    tpu.vector_store %arg6[%c0_11, %c0_12], %12 {strides = array<i32>} : memref<8x128xf32, #tpu.memory_space<vmem>>, vector<8x128xf32>,
    return
  }
  func.func @transform_0(%arg0: i32) -> (i32, i32) {
    %c0_i32 = arith.constant 0 : i32
    %c0_i32_0 = arith.constant 0 : i32
    return %c0_i32, %arg0 : i32, i32
  }
  func.func @transform_1(%arg0: i32) -> (i32, i32) {
    %c0_i32 = arith.constant 0 : i32
    %c0_i32_0 = arith.constant 0 : i32
    %c0_i32_1 = arith.constant 0 : i32
    return %c0_i32, %c0_i32_0 : i32, i32
  }
  func.func @transform_2(%arg0: i32) -> (i32, i32) {
    %c0_i32 = arith.constant 0 : i32
    %c0_i32_0 = arith.constant 0 : i32
    %c0_i32_1 = arith.constant 0 : i32
    return %c0_i32, %c0_i32_0 : i32, i32
  }
  func.func @transform_3(%arg0: i32) -> (i32, i32) {
    %c0_i32 = arith.constant 0 : i32
    %c0_i32_0 = arith.constant 0 : i32
    %c0_i32_1 = arith.constant 0 : i32
    return %c0_i32, %c0_i32_0 : i32, i32
  }
  func.func @transform_4(%arg0: i32) -> (i32, i32) {
    %c0_i32 = arith.constant 0 : i32
    %c0_i32_0 = arith.constant 0 : i32
    %c0_i32_1 = arith.constant 0 : i32
    return %c0_i32, %c0_i32_0 : i32, i32
  }
  func.func @transform_5(%arg0: i32) -> (i32, i32) {
    %c0_i32 = arith.constant 0 : i32
    %c0_i32_0 = arith.constant 0 : i32
    return %c0_i32, %arg0 : i32, i32
  }
}

</mosaic_0001>

<llo_original>
// kernel: tpu_custom_call.1
$region0: #{tpu_custom_call.1}
  #allocation0 [shape = 'u32[]', space=smem, size = 0x4, offset = 0x4, fixed_abs, tag = 'smem constant byte address 0x4 - core index']
  #allocation1 [shape = 'u32[72,128]{1,0:T(1,128)}', space=vmem, size = 0x9000, scoped, tag = 'internal scratch']
  %s0 = inlined_call_operand.vmem [shape: f32[8,128], index: 0, kind: input, shape index: {}]
  %s1 = inlined_call_operand.vmem [shape: f32[128,8], index: 1, kind: input, shape index: {}]
  %s2 = inlined_call_operand.vmem [shape: f32[128,1], index: 2, kind: input, shape index: {}]
  %s3 = inlined_call_operand.vmem [shape: f32[8,128], index: 3, kind: input, shape index: {}]
  %s4 = inlined_call_operand.vmem [shape: f32[8,1], index: 4, kind: input, shape index: {}]
  %s5 = inlined_call_operand.hbm [shape: f32[8,128], index: 5, kind: output, shape index: {}]
  %s6 = sld [smem:[#allocation0]]
  $region30: #{tpu_custom_call.1} parent=0
    _
  %s8 = ssub.s32 1, %s6
  %s9 = scalar_select 0, %s8, %s6
  $region1: #{tpu_custom_call.1} parent=0
    #allocation2 [shape = 'u8[4096]{0}', space=vmem, size = 0x1000, scoped, tag = 'output window, operand 0, single buffered']
    #allocation3 [shape = 's32[1]{0}', space=sflag, size = 0x4, scoped, tag = 'scoped memory for tpu_custom_call.1']
    %10 = vsyncpa [#allocation3], 0
    // Predicated region
    $region2: #{tpu_custom_call.1} parent=1 // pred_check
      _
    $region3: #{tpu_custom_call.1} parent=1 // pred_check_branch
      %12 = sbr.rel (0) target = $region5
    $region4: #{tpu_custom_call.1} parent=1 // pred_region
      _
    $region5: #{tpu_custom_call.1} parent=1 // pred_fallthru
      _
    // Predicated region
    $region6: #{tpu_custom_call.1} parent=1 // pred_check
      _
    $region7: #{tpu_custom_call.1} parent=1 // pred_check_branch
      %14 = sbr.rel (0) target = $region9
    $region8: #{tpu_custom_call.1} parent=1 // pred_region
      _
    $region9: #{tpu_custom_call.1} parent=1 // pred_fallthru
      _
    // Predicated region
    $region10: #{tpu_custom_call.1} parent=1 // pred_check
      _
    $region11: #{tpu_custom_call.1} parent=1 // pred_check_branch
      %16 = sbr.rel (0) target = $region13
    $region12: #{tpu_custom_call.1} parent=1 // pred_region
      _
    $region13: #{tpu_custom_call.1} parent=1 // pred_fallthru
      _
    // Predicated region
    $region14: #{tpu_custom_call.1} parent=1 // pred_check
      _
    $region15: #{tpu_custom_call.1} parent=1 // pred_check_branch
      %18 = sbr.rel (0) target = $region17
    $region16: #{tpu_custom_call.1} parent=1 // pred_region
      _
    $region17: #{tpu_custom_call.1} parent=1 // pred_fallthru
      _
    // Predicated region
    $region18: #{tpu_custom_call.1} parent=1 // pred_check
      _
    $region19: #{tpu_custom_call.1} parent=1 // pred_check_branch
      %20 = sbr.rel (0) target = $region21
    $region20: #{tpu_custom_call.1} parent=1 // pred_region
      _
    $region21: #{tpu_custom_call.1} parent=1 // pred_fallthru
      _
    %v21 = vld [vmem:[%s0] sm:$0xff]
    %v22 = vld [vmem:[%s1] sm:$0xff]
    %v23 = vld [vmem:[%s1 + $0x8] sm:$0xff]
    %v24 = vld [vmem:[%s1 + $0x10] sm:$0xff]
    %v25 = vld [vmem:[%s1 + $0x18] sm:$0xff]
    %v26 = vld [vmem:[%s1 + $0x20] sm:$0xff]
    %v27 = vld [vmem:[%s1 + $0x28] sm:$0xff]
    %v28 = vld [vmem:[%s1 + $0x30] sm:$0xff]
    %v29 = vld [vmem:[%s1 + $0x38] sm:$0xff]
    %v30 = vld [vmem:[%s1 + $0x40] sm:$0xff]
    %v31 = vld [vmem:[%s1 + $0x48] sm:$0xff]
    %v32 = vld [vmem:[%s1 + $0x50] sm:$0xff]
    %v33 = vld [vmem:[%s1 + $0x58] sm:$0xff]
    %v34 = vld [vmem:[%s1 + $0x60] sm:$0xff]
    %v35 = vld [vmem:[%s1 + $0x68] sm:$0xff]
    %v36 = vld [vmem:[%s1 + $0x70] sm:$0xff]
    %v37 = vld [vmem:[%s1 + $0x78] sm:$0xff]
    %v38 = vld [vmem:[%s2] sm:$0xff]
    %v39 = vld [vmem:[%s2 + $0x8] sm:$0xff]
    %v40 = vld [vmem:[%s2 + $0x10] sm:$0xff]
    %v41 = vld [vmem:[%s2 + $0x18] sm:$0xff]
    %v42 = vld [vmem:[%s2 + $0x20] sm:$0xff]
    %v43 = vld [vmem:[%s2 + $0x28] sm:$0xff]
    %v44 = vld [vmem:[%s2 + $0x30] sm:$0xff]
    %v45 = vld [vmem:[%s2 + $0x38] sm:$0xff]
    %v46 = vld [vmem:[%s2 + $0x40] sm:$0xff]
    %v47 = vld [vmem:[%s2 + $0x48] sm:$0xff]
    %v48 = vld [vmem:[%s2 + $0x50] sm:$0xff]
    %v49 = vld [vmem:[%s2 + $0x58] sm:$0xff]
    %v50 = vld [vmem:[%s2 + $0x60] sm:$0xff]
    %v51 = vld [vmem:[%s2 + $0x68] sm:$0xff]
    %v52 = vld [vmem:[%s2 + $0x70] sm:$0xff]
    %v53 = vld [vmem:[%s2 + $0x78] sm:$0xff]
    %55 = vset.pattern.permute.xlu0 0
    %56 = vperm.xlu0 %55, %v38
    %v57 = vpop.permute.xlu0 %56
    %60 = vset.pattern.permute.xlu0 0
    %61 = vperm.xlu0 %60, %v39
    %v62 = vpop.permute.xlu0 %61
    %65 = vset.pattern.permute.xlu0 0
    %66 = vperm.xlu0 %65, %v40
    %v67 = vpop.permute.xlu0 %66
    %70 = vset.pattern.permute.xlu0 0
    %71 = vperm.xlu0 %70, %v41
    %v72 = vpop.permute.xlu0 %71
    %75 = vset.pattern.permute.xlu0 0
    %76 = vperm.xlu0 %75, %v42
    %v77 = vpop.permute.xlu0 %76
    %80 = vset.pattern.permute.xlu0 0
    %81 = vperm.xlu0 %80, %v43
    %v82 = vpop.permute.xlu0 %81
    %85 = vset.pattern.permute.xlu0 0
    %86 = vperm.xlu0 %85, %v44
    %v87 = vpop.permute.xlu0 %86
    %90 = vset.pattern.permute.xlu0 0
    %91 = vperm.xlu0 %90, %v45
    %v92 = vpop.permute.xlu0 %91
    %95 = vset.pattern.permute.xlu0 0
    %96 = vperm.xlu0 %95, %v46
    %v97 = vpop.permute.xlu0 %96
    %100 = vset.pattern.permute.xlu0 0
    %101 = vperm.xlu0 %100, %v47
    %v102 = vpop.permute.xlu0 %101
    %105 = vset.pattern.permute.xlu0 0
    %106 = vperm.xlu0 %105, %v48
    %v107 = vpop.permute.xlu0 %106
    %110 = vset.pattern.permute.xlu0 0
    %111 = vperm.xlu0 %110, %v49
    %v112 = vpop.permute.xlu0 %111
    %115 = vset.pattern.permute.xlu0 0
    %116 = vperm.xlu0 %115, %v50
    %v117 = vpop.permute.xlu0 %116
    %120 = vset.pattern.permute.xlu0 0
    %121 = vperm.xlu0 %120, %v51
    %v122 = vpop.permute.xlu0 %121
    %125 = vset.pattern.permute.xlu0 0
    %126 = vperm.xlu0 %125, %v52
    %v127 = vpop.permute.xlu0 %126
    %130 = vset.pattern.permute.xlu0 0
    %131 = vperm.xlu0 %130, %v53
    %v132 = vpop.permute.xlu0 %131
    %vm134 = vcmask 64512
    %v136 = vsel %vm134, %v22, 0
    %v139 = vsel %vm134, %v23, 0
    %v142 = vsel %vm134, %v24, 0
    %v145 = vsel %vm134, %v25, 0
    %v148 = vsel %vm134, %v26, 0
    %v151 = vsel %vm134, %v27, 0
    %v154 = vsel %vm134, %v28, 0
    %v157 = vsel %vm134, %v29, 0
    %v160 = vsel %vm134, %v30, 0
    %v163 = vsel %vm134, %v31, 0
    %v166 = vsel %vm134, %v32, 0
    %v169 = vsel %vm134, %v33, 0
    %v172 = vsel %vm134, %v34, 0
    %v175 = vsel %vm134, %v35, 0
    %v178 = vsel %vm134, %v36, 0
    %v181 = vsel %vm134, %v37, 0
    %183 = vmatpush.msra.mxu0 0.0
    %184 = vmatpush.msra.mxu0 0.0
    %185 = vmatpush.msra.mxu0 0.0
    %186 = vmatpush.msra.mxu0 0.0
    %187 = vmatpush.msra.mxu0 0.0
    %188 = vmatpush.msra.mxu0 0.0
    %189 = vmatpush.msra.mxu0 0.0
    %190 = vmatpush.msra.mxu0 0.0
    %191 = vmatpush.msra.mxu0 0.0
    %192 = vmatpush.msra.mxu0 0.0
    %193 = vmatpush.msra.mxu0 0.0
    %194 = vmatpush.msra.mxu0 0.0
    %195 = vmatpush.msra.mxu0 0.0
    %196 = vmatpush.msra.mxu0 0.0
    %197 = vmatpush.msra.mxu0 0.0
    %198 = vmatpush.msra.mxu0 %v21
    %199 = vmatmul.f32.gmra.mxu0 %v136
    %v200 = vpop.f32.mrf.mxu0
    %v201 = vadd.f32 %v57, %v200
    %202 = vmatmul.f32.gmra.mxu0 %v139
    %v203 = vpop.f32.mrf.mxu0
    %v204 = vadd.f32 %v62, %v203
    %205 = vmatmul.f32.gmra.mxu0 %v142
    %v206 = vpop.f32.mrf.mxu0
    %v207 = vadd.f32 %v67, %v206
    %208 = vmatmul.f32.gmra.mxu0 %v145
    %v209 = vpop.f32.mrf.mxu0
    %v210 = vadd.f32 %v72, %v209
    %211 = vmatmul.f32.gmra.mxu0 %v148
    %v212 = vpop.f32.mrf.mxu0
    %v213 = vadd.f32 %v77, %v212
    %214 = vmatmul.f32.gmra.mxu0 %v151
    %v215 = vpop.f32.mrf.mxu0
    %v216 = vadd.f32 %v82, %v215
    %217 = vmatmul.f32.gmra.mxu0 %v154
    %v218 = vpop.f32.mrf.mxu0
    %v219 = vadd.f32 %v87, %v218
    %220 = vmatmul.f32.gmra.mxu0 %v157
    %v221 = vpop.f32.mrf.mxu0
    %v222 = vadd.f32 %v92, %v221
    %223 = vmatmul.f32.gmra.mxu0 %v160
    %v224 = vpop.f32.mrf.mxu0
    %v225 = vadd.f32 %v97, %v224
    %226 = vmatmul.f32.gmra.mxu0 %v163
    %v227 = vpop.f32.mrf.mxu0
    %v228 = vadd.f32 %v102, %v227
    %229 = vmatmul.f32.gmra.mxu0 %v166
    %v230 = vpop.f32.mrf.mxu0
    %v231 = vadd.f32 %v107, %v230
    %232 = vmatmul.f32.gmra.mxu0 %v169
    %v233 = vpop.f32.mrf.mxu0
    %v234 = vadd.f32 %v112, %v233
    %235 = vmatmul.f32.gmra.mxu0 %v172
    %v236 = vpop.f32.mrf.mxu0
    %v237 = vadd.f32 %v117, %v236
    %238 = vmatmul.f32.gmra.mxu0 %v175
    %v239 = vpop.f32.mrf.mxu0
    %v240 = vadd.f32 %v122, %v239
    %241 = vmatmul.f32.gmra.mxu0 %v178
    %v242 = vpop.f32.mrf.mxu0
    %v243 = vadd.f32 %v127, %v242
    %244 = vmatmul.f32.gmra.mxu0 %v181
    %v245 = vpop.f32.mrf.mxu0
    %v246 = vadd.f32 %v132, %v245
    %247 = vdwg.mxu0
    %v248 = vmax.f32 %v201, 0.0
    %v249 = vmax.f32 %v204, 0.0
    %v250 = vmax.f32 %v207, 0.0
    %v251 = vmax.f32 %v210, 0.0
    %v252 = vmax.f32 %v213, 0.0
    %v253 = vmax.f32 %v216, 0.0
    %v254 = vmax.f32 %v219, 0.0
    %v255 = vmax.f32 %v222, 0.0
    %v256 = vmax.f32 %v225, 0.0
    %v257 = vmax.f32 %v228, 0.0
    %v258 = vmax.f32 %v231, 0.0
    %v259 = vmax.f32 %v234, 0.0
    %v260 = vmax.f32 %v237, 0.0
    %v261 = vmax.f32 %v240, 0.0
    %v262 = vmax.f32 %v243, 0.0
    %v263 = vmax.f32 %v246, 0.0
    %v264 = vld [vmem:[%s3] sm:$0xff]
    %v265 = vld [vmem:[%s4] sm:$0xff]
    %267 = vset.pattern.permute.xlu0 0
    %268 = vperm.xlu0 %267, %v265
    %v269 = vpop.permute.xlu0 %268
    %271 = vmatpush.msra.mxu0 %v263
    %272 = vmatpush.msra.mxu0 %v262
    %273 = vmatpush.msra.mxu0 %v261
    %274 = vmatpush.msra.mxu0 %v260
    %275 = vmatpush.msra.mxu0 %v259
    %276 = vmatpush.msra.mxu0 %v258
    %277 = vmatpush.msra.mxu0 %v257
    %278 = vmatpush.msra.mxu0 %v256
    %279 = vmatpush.msra.mxu0 %v255
    %280 = vmatpush.msra.mxu0 %v254
    %281 = vmatpush.msra.mxu0 %v253
    %282 = vmatpush.msra.mxu0 %v252
    %283 = vmatpush.msra.mxu0 %v251
    %284 = vmatpush.msra.mxu0 %v250
    %285 = vmatpush.msra.mxu0 %v249
    %286 = vmatpush.msra.mxu0 %v248
    %287 = vmatmul.f32.gmra.mxu0 %v264
    %v288 = vpop.f32.mrf.mxu0
    %v289 = vadd.f32 %v269, %v288
    %290 = vdwg.mxu0
    %291 = vst [vmem:[#allocation2] sm:$0xff] %v289
    // Predicated region
    $region22: #{tpu_custom_call.1} parent=1 // pred_check
      _
    $region23: #{tpu_custom_call.1} parent=1 // pred_check_branch
      %293 = sbr.rel (0) target = $region25
    $region24: #{tpu_custom_call.1} parent=1 // pred_region
      %295 = vsyncadd [#allocation3], 0
      %s297 = sshll.u32 [#allocation2], 4
      %s298 = int_to_ptr.vmem [resolvable:$true] %s297
      %s299 = sshll.u32 %s5, 4
      %s300 = int_to_ptr.hbm [resolvable:$true] %s299
      %302 = dma.vmem_to_hbm [thread:$0]  %s298, 128, %s300, [#allocation3]
    $region25: #{tpu_custom_call.1} parent=1 // pred_fallthru
      _
    // Predicated region
    $region26: #{tpu_custom_call.1} parent=1 // pred_check
      _
    $region27: #{tpu_custom_call.1} parent=1 // pred_check_branch
      %304 = sbr.rel (0) target = $region29
    $region28: #{tpu_custom_call.1} parent=1 // pred_region
      %306 = dma.done [#allocation3], 128
    $region29: #{tpu_custom_call.1} parent=1 // pred_fallthru
      _
    %307 = vsyncpa [#allocation3], 1

</llo_original>
